<compile_context>
chip_gen: v7x
topology: tpu7x:2x2x1
jax: 0.10.0
libtpu: 0.0.40
codegen_flags: <defaults>
</compile_context>

<pallas_src>
import jax
import jax.numpy as jnp
from jax.experimental import pallas as pl
from jax.experimental.pallas import tpu as pltpu


# ----------------------------------------------------------------------------- kernel
def custom_head_kernel(x_ref, w_ref, b_ref, o_ref):
    # x_ref : VMEM (tile_b, D*T)  batch tile of features in native layout, flattened
    # w_ref : VMEM (D*T, O)       eta-folded linear-head weight (resident, fetched once)
    # b_ref : VMEM (1, O)         folded bias: sum(eta)*b + T0   (f32)
    # o_ref : VMEM (tile_b, O)    output tile
    y = jnp.dot(x_ref[...], w_ref[...], preferred_element_type=jnp.float32)
    o_ref[...] = (y + b_ref[...]).astype(o_ref.dtype)


# ----------------------------------------------------------------------------- tiling helpers
_LANE = 128
_MAX_TILE_B_AUTO = 4096      # ~8.5 MiB/step footprint -> fits default scoped VMEM everywhere
_MAX_TILE_B_USER = 8192      # beyond this the vmem limit bump would get uncomfortable on v7x
_SINGLE_BLOCK_MAX_X_BYTES = 1 << 20   # <= 1 MiB of x: one grid step beats any pipelining


def _round_up8(n):
    return ((n + 7) // 8) * 8


def _round_down8(n):
    return max(8, (n // 8) * 8)


def _pick_tile_b(B, K, itemsize, tile_b):
    """Choose the batch tile. Result is either == B or a multiple of 8."""
    if tile_b is not None:
        if tile_b >= B:
            return B
        tb = min(_round_down8(tile_b), _MAX_TILE_B_USER)
        return B if tb >= B else tb
    # Automatic choice.
    if B * K * itemsize <= _SINGLE_BLOCK_MAX_X_BYTES or B <= 8:
        return B                                   # single grid step, no pipeline overhead
    # >= 2 balanced steps (feeds both TensorCores on v7x), capped for VMEM.
    tb = min(_MAX_TILE_B_AUTO, _round_up8(pl.cdiv(B, 2)))
    return B if tb >= B else tb


def _vmem_estimate(tb, K, O, in_itemsize, out_itemsize):
    """Per-step VMEM footprint, including lane padding of the narrow output."""
    k_pad = _round_up8(pl.cdiv(K, _LANE)) * _LANE // 8 * 8  # lane-pad K (already 128-mult here)
    k_pad = ((K + _LANE - 1) // _LANE) * _LANE
    o_pad = ((O + _LANE - 1) // _LANE) * _LANE
    return (2 * tb * k_pad * in_itemsize        # double-buffered x tile
            + 2 * tb * o_pad * out_itemsize     # double-buffered, lane-padded out tile
            + k_pad * o_pad * in_itemsize       # folded weight (resident)
            + 8 * o_pad * 4)                    # folded bias (sublane/lane padded)


# ----------------------------------------------------------------------------- wrapper
def custom_head(x, w, b, eta, t0, *, tile_b=None):
    """x: (B, input_dim, num_trees) -> (B, output_dim). Dtype of x is preserved."""
    B, D, T = x.shape
    O = w.shape[1]
    K = D * T
    in_itemsize = jnp.dtype(x.dtype).itemsize

    # --- parameter folding (tiny tensors; negligible wrapper cost) ------------
    # W'[d*T + t, o] = eta[t] * W[d, o]  so that  x.reshape(B, D*T) @ W'
    #   == sum_t eta[t] * (x[:, :, t] @ W)
    w_f = (w[:, None, :] * eta[None, :, None]).reshape(K, O).astype(x.dtype)
    b_f = (jnp.sum(eta) * b + t0).reshape(1, O).astype(jnp.float32)

    # Native-layout flatten of contiguous trailing dims: no data movement.
    x_flat = x.reshape(B, K)

    # --- batch tiling ----------------------------------------------------------
    tb = _pick_tile_b(B, K, in_itemsize, tile_b)
    grid = (pl.cdiv(B, tb),)

    # --- compiler params: only raise the scoped-VMEM limit when actually needed.
    cp_kwargs = dict(dimension_semantics=("parallel",))
    vmem_need = _vmem_estimate(tb, K, O, in_itemsize, in_itemsize)
    if vmem_need > (14 << 20):                       # beyond v5e's 16 MiB default (with slack)
        cp_kwargs["vmem_limit_bytes"] = min(vmem_need + (2 << 20), 48 << 20)
    compiler_params = pltpu.CompilerParams(**cp_kwargs)

    return pl.pallas_call(
        custom_head_kernel,
        out_shape=jax.ShapeDtypeStruct((B, O), x.dtype),
        grid=grid,
        in_specs=[
            pl.BlockSpec((tb, K), lambda i: (i, 0)),   # x tile over batch (lane-dense K)
            pl.BlockSpec((K, O), lambda i: (0, 0)),    # folded weight (constant index -> fetched once)
            pl.BlockSpec((1, O), lambda i: (0, 0)),    # folded bias   (constant index -> fetched once)
        ],
        out_specs=pl.BlockSpec((tb, O), lambda i: (i, 0)),
        compiler_params=compiler_params,
    )(x_flat, w_f, b_f)


# ----------------------------------------------------------------------------- reference
def custom_head_ref(x, w, b, eta, t0):
    # Pure-JAX reference mirroring the PyTorch forward exactly.
    y = jnp.einsum('btd,do->bto', jnp.transpose(x, (0, 2, 1)), w) + b  # head(x.transpose(2,1))
    y = y * eta.reshape(1, -1, 1)
    y = y.sum(axis=1)
    return y + t0


if __name__ == "__main__":
    # Small shapes consistent with the module.
    B = 8          # batch
    D = 32         # input_dim
    T = 4          # num_trees
    O = 8          # output_dim

    key = jax.random.PRNGKey(0)
    kx, kw, kb, ke, kt = jax.random.split(key, 5)

    x = jax.random.normal(kx, (B, D, T), dtype=jnp.float32)          # backbone_features
    w = jax.random.uniform(kw, (D, O), dtype=jnp.float32, minval=-0.2, maxval=0.2)
    b = jax.random.uniform(kb, (O,), dtype=jnp.float32, minval=-0.2, maxval=0.2)
    eta = jax.random.uniform(ke, (T,), dtype=jnp.float32)            # nn.Parameter(torch.rand(num_trees))
    t0 = jax.random.uniform(kt, (O,), dtype=jnp.float32)             # nn.Parameter(torch.rand(output_dim))

    # Small-shape check: single-block path (tb == B, grid=(1,)).
    out = jax.block_until_ready(custom_head(x, w, b, eta, t0))
    ref = custom_head_ref(x, w, b, eta, t0)
    assert out.shape == (B, O)
    assert jnp.allclose(out, ref, atol=1e-5, rtol=1e-5)

    # Larger-batch check exercising the tiled path: B=8192 -> tb=4096, 2 grid steps
    # (two balanced "parallel" steps -> both TensorCores busy on v7x).
    B2 = 8192
    x2 = jax.random.normal(jax.random.PRNGKey(1), (B2, D, T), dtype=jnp.float32)
    out2 = jax.block_until_ready(custom_head(x2, w, b, eta, t0))
    ref2 = custom_head_ref(x2, w, b, eta, t0)
    assert out2.shape == (B2, O)
    assert jnp.allclose(out2, ref2, atol=1e-4, rtol=1e-5)

    print("KERNEL_OK")
</pallas_src>

<mosaic_0001>
module attributes {stable_mosaic.version = 11 : i64} {
  func.func @custom_head_kernel(%arg0: i32, %arg1: memref<8x128xf32, #tpu.memory_space<vmem>>, %arg2: memref<128x8xf32, #tpu.memory_space<vmem>>, %arg3: memref<1x8xf32, #tpu.memory_space<vmem>>, %arg4: memref<8x8xf32, #tpu.memory_space<vmem>>) attributes {dimension_semantics = [#tpu.dimension_semantics<parallel>], iteration_bounds = array<i64: 1>, scalar_prefetch = 0 : i64, scratch_operands = 0 : i64, tpu.core_type = #tpu.core_type<tc>, window_params = [{transform_indices = @transform_0, window_bounds = array<i64: 8, 128>}, {pipeline_mode = #tpu.pipeline_mode<synchronous>, transform_indices = @transform_1, window_bounds = array<i64: 128, 8>}, {pipeline_mode = #tpu.pipeline_mode<synchronous>, transform_indices = @transform_2, window_bounds = array<i64: 1, 8>}, {transform_indices = @transform_3, window_bounds = array<i64: 8, 8>}]} {
    %c0 = arith.constant 0 : index
    %c0_0 = arith.constant 0 : index
    %0 = vector.load %arg1[%c0, %c0_0] : memref<8x128xf32, #tpu.memory_space<vmem>>, vector<8x128xf32>
    %c0_1 = arith.constant 0 : index
    %c0_2 = arith.constant 0 : index
    %1 = vector.load %arg2[%c0_1, %c0_2] : memref<128x8xf32, #tpu.memory_space<vmem>>, vector<128x8xf32>
    %cst = arith.constant dense<0.000000e+00> : vector<8x8xf32>
    %2 = tpu.matmul %0, %1, %cst {dimension_numbers = #tpu.dot_dimension_numbers<[1], [0], [0], [1], [0, 0, 1, 1], [], []>} : vector<8x128xf32>, vector<128x8xf32>, vector<8x8xf32> -> vector<8x8xf32>
    %c0_3 = arith.constant 0 : index
    %c0_4 = arith.constant 0 : index
    %3 = vector.load %arg3[%c0_3, %c0_4] : memref<1x8xf32, #tpu.memory_space<vmem>>, vector<1x8xf32>
    %4 = vector.broadcast %3 : vector<1x8xf32> to vector<8x8xf32>
    %5 = arith.addf %2, %4 : vector<8x8xf32>
    %c0_5 = arith.constant 0 : index
    %c0_6 = arith.constant 0 : index
    %6 = vector.load %arg4[%c0_5, %c0_6] : memref<8x8xf32, #tpu.memory_space<vmem>>, vector<8x8xf32>
    tpu.vector_store %arg4[%c0_5, %c0_6], %5 {strides = array<i32>} : memref<8x8xf32, #tpu.memory_space<vmem>>, vector<8x8xf32>,
    return
  }
  func.func @transform_0(%arg0: i32) -> (i32, i32) {
    %c0_i32 = arith.constant 0 : i32
    %c0_i32_0 = arith.constant 0 : i32
    return %arg0, %c0_i32 : i32, i32
  }
  func.func @transform_1(%arg0: i32) -> (i32, i32) {
    %c0_i32 = arith.constant 0 : i32
    %c0_i32_0 = arith.constant 0 : i32
    %c0_i32_1 = arith.constant 0 : i32
    return %c0_i32, %c0_i32_0 : i32, i32
  }
  func.func @transform_2(%arg0: i32) -> (i32, i32) {
    %c0_i32 = arith.constant 0 : i32
    %c0_i32_0 = arith.constant 0 : i32
    %c0_i32_1 = arith.constant 0 : i32
    return %c0_i32, %c0_i32_0 : i32, i32
  }
  func.func @transform_3(%arg0: i32) -> (i32, i32) {
    %c0_i32 = arith.constant 0 : i32
    %c0_i32_0 = arith.constant 0 : i32
    return %arg0, %c0_i32 : i32, i32
  }
}

</mosaic_0001>

<llo_original>
// kernel: tpu_custom_call.1
$region0: #{tpu_custom_call.1}
  #allocation0 [shape = 'u32[]', space=smem, size = 0x4, offset = 0x4, fixed_abs, tag = 'smem constant byte address 0x4 - core index']
  #allocation1 [shape = 'u32[144,128]{1,0:T(1,128)}', space=vmem, size = 0x12000, scoped, tag = 'internal scratch']
  %s0 = inlined_call_operand.vmem [shape: f32[8,128], index: 0, kind: input, shape index: {}]
  %s1 = inlined_call_operand.vmem [shape: f32[128,8], index: 1, kind: input, shape index: {}]
  %s2 = inlined_call_operand.vmem [shape: f32[1,8], index: 2, kind: input, shape index: {}]
  %s3 = inlined_call_operand.hbm [shape: f32[8,8], index: 3, kind: output, shape index: {}]
  %s4 = sld [smem:[#allocation0]]
  $region22: #{tpu_custom_call.1} parent=0
    _
  %s6 = ssub.s32 1, %s4
  %s7 = scalar_select 0, %s6, %s4
  $region1: #{tpu_custom_call.1} parent=0
    #allocation2 [shape = 'u8[4096]{0}', space=vmem, size = 0x1000, scoped, tag = 'output window, operand 0, single buffered']
    #allocation3 [shape = 's32[1]{0}', space=sflag, size = 0x4, scoped, tag = 'scoped memory for tpu_custom_call.1']
    %8 = vsyncpa [#allocation3], 0
    // Predicated region
    $region2: #{tpu_custom_call.1} parent=1 // pred_check
      _
    $region3: #{tpu_custom_call.1} parent=1 // pred_check_branch
      %10 = sbr.rel (0) target = $region5
    $region4: #{tpu_custom_call.1} parent=1 // pred_region
      _
    $region5: #{tpu_custom_call.1} parent=1 // pred_fallthru
      _
    // Predicated region
    $region6: #{tpu_custom_call.1} parent=1 // pred_check
      _
    $region7: #{tpu_custom_call.1} parent=1 // pred_check_branch
      %12 = sbr.rel (0) target = $region9
    $region8: #{tpu_custom_call.1} parent=1 // pred_region
      _
    $region9: #{tpu_custom_call.1} parent=1 // pred_fallthru
      _
    // Predicated region
    $region10: #{tpu_custom_call.1} parent=1 // pred_check
      _
    $region11: #{tpu_custom_call.1} parent=1 // pred_check_branch
      %14 = sbr.rel (0) target = $region13
    $region12: #{tpu_custom_call.1} parent=1 // pred_region
      _
    $region13: #{tpu_custom_call.1} parent=1 // pred_fallthru
      _
    %v15 = vld [vmem:[%s0] sm:$0xff]
    %v16 = vld [vmem:[%s1] sm:$0xff]
    %v17 = vld [vmem:[%s1 + $0x8] sm:$0xff]
    %v18 = vld [vmem:[%s1 + $0x10] sm:$0xff]
    %v19 = vld [vmem:[%s1 + $0x18] sm:$0xff]
    %v20 = vld [vmem:[%s1 + $0x20] sm:$0xff]
    %v21 = vld [vmem:[%s1 + $0x28] sm:$0xff]
    %v22 = vld [vmem:[%s1 + $0x30] sm:$0xff]
    %v23 = vld [vmem:[%s1 + $0x38] sm:$0xff]
    %v24 = vld [vmem:[%s1 + $0x40] sm:$0xff]
    %v25 = vld [vmem:[%s1 + $0x48] sm:$0xff]
    %v26 = vld [vmem:[%s1 + $0x50] sm:$0xff]
    %v27 = vld [vmem:[%s1 + $0x58] sm:$0xff]
    %v28 = vld [vmem:[%s1 + $0x60] sm:$0xff]
    %v29 = vld [vmem:[%s1 + $0x68] sm:$0xff]
    %v30 = vld [vmem:[%s1 + $0x70] sm:$0xff]
    %v31 = vld [vmem:[%s1 + $0x78] sm:$0xff]
    %v32 = vld [vmem:[%s2] sm:$0x1]
    %v34 = vlaneseq
    %v35 = vshrl.u32 %v34, 7
    %v36 = vsub.s32 0, %v35
    %v37 = vrot.slane %v32, %v36
    %39 = vmatprep.subr.mxu0 0.0
    %40 = vmatpush1.msra.mxu0 %v16
    %41 = vmatprep.subr.mxu0 0.0
    %42 = vmatpush1.msra.mxu0 %v17
    %43 = vmatprep.subr.mxu0 0.0
    %44 = vmatpush1.msra.mxu0 %v18
    %45 = vmatprep.subr.mxu0 0.0
    %46 = vmatpush1.msra.mxu0 %v19
    %47 = vmatprep.subr.mxu0 0.0
    %48 = vmatpush1.msra.mxu0 %v20
    %49 = vmatprep.subr.mxu0 0.0
    %50 = vmatpush1.msra.mxu0 %v21
    %51 = vmatprep.subr.mxu0 0.0
    %52 = vmatpush1.msra.mxu0 %v22
    %53 = vmatprep.subr.mxu0 0.0
    %54 = vmatpush1.msra.mxu0 %v23
    %55 = vmatprep.subr.mxu0 0.0
    %56 = vmatpush1.msra.mxu0 %v24
    %57 = vmatprep.subr.mxu0 0.0
    %58 = vmatpush1.msra.mxu0 %v25
    %59 = vmatprep.subr.mxu0 0.0
    %60 = vmatpush1.msra.mxu0 %v26
    %61 = vmatprep.subr.mxu0 0.0
    %62 = vmatpush1.msra.mxu0 %v27
    %63 = vmatprep.subr.mxu0 0.0
    %64 = vmatpush1.msra.mxu0 %v28
    %65 = vmatprep.subr.mxu0 0.0
    %66 = vmatpush1.msra.mxu0 %v29
    %67 = vmatprep.subr.mxu0 0.0
    %68 = vmatpush1.msra.mxu0 %v30
    %69 = vmatprep.subr.mxu0 0.0
    %70 = vmatpush1.msra.mxu0 %v31
    %71 = vmatprep.subr.mxu0 0.0
    %72 = vmatpush1.msra.mxu0 0.0
    %73 = vmatprep.subr.mxu0 0.0
    %74 = vmatpush1.msra.mxu0 0.0
    %75 = vmatprep.subr.mxu0 0.0
    %76 = vmatpush1.msra.mxu0 0.0
    %77 = vmatprep.subr.mxu0 0.0
    %78 = vmatpush1.msra.mxu0 0.0
    %79 = vmatprep.subr.mxu0 0.0
    %80 = vmatpush1.msra.mxu0 0.0
    %81 = vmatprep.subr.mxu0 0.0
    %82 = vmatpush1.msra.mxu0 0.0
    %83 = vmatprep.subr.mxu0 0.0
    %84 = vmatpush1.msra.mxu0 0.0
    %85 = vmatprep.subr.mxu0 0.0
    %86 = vmatpush1.msra.mxu0 0.0
    %87 = vmatprep.subr.mxu0 0.0
    %88 = vmatpush1.msra.mxu0 0.0
    %89 = vmatprep.subr.mxu0 0.0
    %90 = vmatpush1.msra.mxu0 0.0
    %91 = vmatprep.subr.mxu0 0.0
    %92 = vmatpush1.msra.mxu0 0.0
    %93 = vmatprep.subr.mxu0 0.0
    %94 = vmatpush1.msra.mxu0 0.0
    %95 = vmatprep.subr.mxu0 0.0
    %96 = vmatpush1.msra.mxu0 0.0
    %97 = vmatprep.subr.mxu0 0.0
    %98 = vmatpush1.msra.mxu0 0.0
    %99 = vmatprep.subr.mxu0 0.0
    %100 = vmatpush1.msra.mxu0 0.0
    %101 = vmatprep.subr.mxu0 0.0
    %102 = vmatpush1.msra.mxu0 0.0
    %103 = vmatprep.mubr.f32.mxu0 0.0
    %104 = vmatmul.mubr.f32.gmra.mrb[0].mxu0 %v15
    %v105 = vpop.f32.mrb[0].mxu0
    %v106 = vadd.f32 %v37, %v105
    %v107 = vpop.f32.mrb[0].mxu0
    %108 = vdwg.mxu0
    %vm109 = vcmask 64512
    %110 = vst.msk [vmem:[#allocation2] sm:$0xff] %vm109, %v106
    // Predicated region
    $region14: #{tpu_custom_call.1} parent=1 // pred_check
      _
    $region15: #{tpu_custom_call.1} parent=1 // pred_check_branch
      %112 = sbr.rel (0) target = $region17
    $region16: #{tpu_custom_call.1} parent=1 // pred_region
      %s114 = ssub.s32 128, 128
      %115 = vsyncadd [#allocation3], %s114
      %s117 = sshll.u32 [#allocation2], 4
      %s118 = int_to_ptr.vmem [resolvable:$true] %s117
      %120 = dma.vmem_to_hbm [thread:$0]  %s118, 128, %s3, [#allocation3]
    $region17: #{tpu_custom_call.1} parent=1 // pred_fallthru
      _
    // Predicated region
    $region18: #{tpu_custom_call.1} parent=1 // pred_check
      _
    $region19: #{tpu_custom_call.1} parent=1 // pred_check_branch
      %122 = sbr.rel (0) target = $region21
    $region20: #{tpu_custom_call.1} parent=1 // pred_region
      %123 = dma.done [#allocation3], 128
    $region21: #{tpu_custom_call.1} parent=1 // pred_fallthru
      _
    %124 = vsyncpa [#allocation3], 1

</llo_original>
